<compile_context>
chip_gen: v6e
topology: v6e:2x2x1
jax: 0.10.0
libtpu: 0.0.40
codegen_flags: <defaults>
</compile_context>

<pallas_src>
import functools

import jax
import jax.numpy as jnp
import numpy as np
from jax.experimental import pallas as pl
from jax.experimental.pallas import tpu as pltpu


def _ce2d_kernel(p0_ref, p1_ref, p2_ref, tgt_ref, out_ref, sum_sc, cnt_sc,
                 *, ignore_label, num_pixels):
    n = pl.program_id(0)
    j = pl.program_id(1)
    step = n * pl.num_programs(1) + j
    last_step = pl.num_programs(0) * pl.num_programs(1) - 1

    @pl.when(step == 0)
    def _init():
        sum_sc[...] = jnp.zeros_like(sum_sc)
        cnt_sc[...] = jnp.zeros_like(cnt_sc)

    C = p0_ref.shape[1]
    TL = tgt_ref.shape[-1]

    # ---- target-dependent work: computed once per tile, shared by all 3 preds ----
    tgt = tgt_ref[0]                                             # (1, TL) int32
    lane = jax.lax.broadcasted_iota(jnp.int32, (1, TL), 1)       # pixel index in tile
    in_bounds = (j * TL + lane) < num_pixels                     # masks ragged tail
    valid = (tgt != ignore_label) & in_bounds                    # (1, TL)
    safe_tgt = jnp.where(valid, tgt, 0)                          # in-range index for ignored
    class_ids = jax.lax.broadcasted_iota(jnp.int32, (C, TL), 0)  # (C, TL)
    onehot = class_ids == safe_tgt                               # broadcast over sublanes
    valid_f = valid.astype(jnp.float32)

    def nll(p_ref):
        x = p_ref[0].astype(jnp.float32)                                     # (C, TL)
        m = jnp.max(x, axis=0, keepdims=True)                                # (1, TL)
        lse = jnp.log(jnp.sum(jnp.exp(x - m), axis=0, keepdims=True)) + m    # (1, TL)
        picked = jnp.sum(jnp.where(onehot, x, 0.0), axis=0, keepdims=True)   # x[target]
        # -log_softmax(x)[target] = lse - x[target]; zero out ignored / OOB pixels.
        return jnp.where(valid, lse - picked, 0.0)                           # (1, TL)

    # lane-wide accumulation; no cross-lane reduction on the per-tile path
    sum_sc[...] += (1.0 * nll(p0_ref) + 0.4 * nll(p1_ref) + 0.4 * nll(p2_ref))
    cnt_sc[...] += valid_f

    @pl.when(step == last_step)
    def _finalize():
        total = jnp.sum(sum_sc[...], keepdims=True)   # (1, 1)
        count = jnp.sum(cnt_sc[...], keepdims=True)   # (1, 1)
        out_ref[...] = total / count


def _choose_tile(num_pixels, num_classes, *, max_tl=4096,
                 budget_bytes=12 * 1024 * 1024):
    """Pick a lane tile (multiple of 128, or the full pixel extent) that keeps the
    double-buffered inputs (3 f32 preds + 1 i32 target per pixel column) within
    the VMEM budget."""
    bytes_per_px = 2 * (3 * num_classes + 1) * 4
    tl = budget_bytes // max(bytes_per_px, 1)
    tl = int(max(128, min(max_tl, tl)))
    tl = (tl // 128) * 128
    if num_pixels <= tl:
        return num_pixels, 1                      # single full-width tile per image
    return tl, -(-num_pixels // tl)               # ragged tail masked in kernel


def cross_entropy_loss_2d(pred, pred1, pred2, target, *, ignore_label=255):
    """Pallas implementation of CrossEntropyLoss2d.forward. Returns a scalar f32."""
    N, C, H, W = pred.shape
    L = H * W

    # Free reshapes only (no transpose, no padding): NCHW -> (N, C, L); target -> (N, 1, L).
    p0 = pred.reshape(N, C, L)
    p1 = pred1.reshape(N, C, L)
    p2 = pred2.reshape(N, C, L)
    tgt = target.reshape(N, 1, L).astype(jnp.int32)

    TL, num_tiles = _choose_tile(L, C)

    kernel = functools.partial(_ce2d_kernel, ignore_label=ignore_label,
                               num_pixels=L)

    pred_spec = pl.BlockSpec((1, C, TL), lambda n, j: (n, 0, j))
    tgt_spec = pl.BlockSpec((1, 1, TL), lambda n, j: (n, 0, j))

    out = pl.pallas_call(
        kernel,
        out_shape=jax.ShapeDtypeStruct((1, 1), jnp.float32),
        grid_spec=pltpu.PrefetchScalarGridSpec(
            num_scalar_prefetch=0,
            grid=(N, num_tiles),
            in_specs=[pred_spec, pred_spec, pred_spec, tgt_spec],
            out_specs=pl.BlockSpec((1, 1), lambda n, j: (0, 0)),
            scratch_shapes=[
                pltpu.VMEM((1, TL), jnp.float32),  # weighted NLL per-lane accumulator
                pltpu.VMEM((1, TL), jnp.float32),  # valid-pixel per-lane count
            ],
        ),
        compiler_params=pltpu.CompilerParams(
            dimension_semantics=("arbitrary", "arbitrary"),
            vmem_limit_bytes=32 * 1024 * 1024),
    )(p0, p1, p2, tgt)
    return out[0, 0]


def _reference(pred, pred1, pred2, target, ignore_label=255):
    """Pure-JAX reference reproducing torch NLLLoss(mean, ignore_index)."""
    def one(p):
        logp = jax.nn.log_softmax(p.astype(jnp.float32), axis=1)        # (N,C,H,W)
        valid = target != ignore_label
        safe_t = jnp.where(valid, target, 0)
        picked = jnp.take_along_axis(logp, safe_t[:, None].astype(jnp.int32),
                                     axis=1)[:, 0]                      # (N,H,W)
        return jnp.sum(jnp.where(valid, -picked, 0.0)) / jnp.sum(valid)
    return 1.0 * one(pred) + 0.4 * one(pred1) + 0.4 * one(pred2)


if __name__ == "__main__":
    key = jax.random.PRNGKey(0)
    k0, k1, k2, kt, km = jax.random.split(key, 5)

    N, C, H, W = 2, 8, 16, 16
    IGNORE = 255

    pred = jax.random.normal(k0, (N, C, H, W), dtype=jnp.float32)
    pred1 = jax.random.normal(k1, (N, C, H, W), dtype=jnp.float32)
    pred2 = jax.random.normal(k2, (N, C, H, W), dtype=jnp.float32)
    target = jax.random.randint(kt, (N, H, W), 0, C, dtype=jnp.int32)
    # sprinkle in some ignored pixels
    ignore_mask = jax.random.bernoulli(km, 0.1, (N, H, W))
    target = jnp.where(ignore_mask, IGNORE, target)

    loss = cross_entropy_loss_2d(pred, pred1, pred2, target, ignore_label=IGNORE)
    loss = jax.block_until_ready(loss)

    ref = jax.block_until_ready(_reference(pred, pred1, pred2, target, IGNORE))
    np.testing.assert_allclose(np.asarray(loss), np.asarray(ref), rtol=1e-5, atol=1e-5)

    print("KERNEL_OK")
</pallas_src>

<mosaic_0001>
module attributes {stable_mosaic.version = 11 : i64} {
  func.func @_ce2d_kernel(%arg0: i32, %arg1: i32, %arg2: memref<1x8x256xf32, #tpu.memory_space<vmem>>, %arg3: memref<1x8x256xf32, #tpu.memory_space<vmem>>, %arg4: memref<1x8x256xf32, #tpu.memory_space<vmem>>, %arg5: memref<1x1x256xi32, #tpu.memory_space<vmem>>, %arg6: memref<1x1xf32, #tpu.memory_space<vmem>>, %arg7: memref<1x256xf32, #tpu.memory_space<vmem>>, %arg8: memref<1x256xf32, #tpu.memory_space<vmem>>) attributes {dimension_semantics = [#tpu.dimension_semantics<arbitrary>, #tpu.dimension_semantics<arbitrary>], iteration_bounds = array<i64: 2, 1>, scalar_prefetch = 0 : i64, scratch_operands = 2 : i64, tpu.core_type = #tpu.core_type<tc>, window_params = [{transform_indices = @transform_0, window_bounds = array<i64: 1, 8, 256>}, {transform_indices = @transform_1, window_bounds = array<i64: 1, 8, 256>}, {transform_indices = @transform_2, window_bounds = array<i64: 1, 8, 256>}, {transform_indices = @transform_3, window_bounds = array<i64: 1, 1, 256>}, {pipeline_mode = #tpu.pipeline_mode<synchronous>, transform_indices = @transform_4, window_bounds = array<i64: 1, 1>}]} {
    %c1_i32 = arith.constant 1 : i32
    %0 = arith.muli %arg0, %c1_i32 : i32
    %1 = arith.addi %0, %arg1 : i32
    %c0_i32 = arith.constant 0 : i32
    %2 = arith.cmpi eq, %1, %c0_i32 : i32
    %3 = arith.extui %2 : i1 to i32
    %c0_i32_0 = arith.constant 0 : i32
    %4 = arith.cmpi ne, %3, %c0_i32_0 : i32
    scf.if %4 {
      %cst_41 = arith.constant 0.000000e+00 : f32
      %94 = vector.broadcast %cst_41 : f32 to vector<1x256xf32>
      %c0_42 = arith.constant 0 : index
      %c0_43 = arith.constant 0 : index
      %95 = vector.load %arg7[%c0_42, %c0_43] : memref<1x256xf32, #tpu.memory_space<vmem>>, vector<1x256xf32>
      tpu.vector_store %arg7[%c0_42, %c0_43], %94 {strides = array<i32>} : memref<1x256xf32, #tpu.memory_space<vmem>>, vector<1x256xf32>,
      %cst_44 = arith.constant 0.000000e+00 : f32
      %96 = vector.broadcast %cst_44 : f32 to vector<1x256xf32>
      %c0_45 = arith.constant 0 : index
      %c0_46 = arith.constant 0 : index
      %97 = vector.load %arg8[%c0_45, %c0_46] : memref<1x256xf32, #tpu.memory_space<vmem>>, vector<1x256xf32>
      tpu.vector_store %arg8[%c0_45, %c0_46], %96 {strides = array<i32>} : memref<1x256xf32, #tpu.memory_space<vmem>>, vector<1x256xf32>,
    } else {
    }
    %c0 = arith.constant 0 : index
    %c0_1 = arith.constant 0 : index
    %c0_2 = arith.constant 0 : index
    %5 = vector.load %arg5[%c0, %c0_1, %c0_2] : memref<1x1x256xi32, #tpu.memory_space<vmem>>, vector<1x1x256xi32>
    %6 = vector.shape_cast %5 : vector<1x1x256xi32> to vector<1x256xi32>
    %7 = tpu.iota {dimensions = array<i32: 1>} : vector<1x256xi32>
    %c256_i32 = arith.constant 256 : i32
    %8 = arith.muli %arg1, %c256_i32 : i32
    %9 = vector.broadcast %8 : i32 to vector<1x256xi32>
    %10 = arith.addi %9, %7 : vector<1x256xi32>
    %c256_i32_3 = arith.constant 256 : i32
    %11 = vector.broadcast %c256_i32_3 : i32 to vector<1x256xi32>
    %12 = arith.cmpi slt, %10, %11 : vector<1x256xi32>
    %c255_i32 = arith.constant 255 : i32
    %13 = vector.broadcast %c255_i32 : i32 to vector<1x256xi32>
    %14 = arith.cmpi ne, %6, %13 : vector<1x256xi32>
    %15 = arith.andi %14, %12 : vector<1x256xi1>
    %c0_i32_4 = arith.constant 0 : i32
    %16 = vector.broadcast %c0_i32_4 : i32 to vector<1x256xi32>
    %17 = arith.select %15, %6, %16 : vector<1x256xi1>, vector<1x256xi32>
    %18 = tpu.iota {dimensions = array<i32: 0>} : vector<8x256xi32>
    %19 = vector.broadcast %17 : vector<1x256xi32> to vector<8x256xi32>
    %20 = arith.cmpi eq, %18, %19 : vector<8x256xi32>
    %21 = arith.extui %15 : vector<1x256xi1> to vector<1x256xi32>
    %22 = arith.sitofp %21 : vector<1x256xi32> to vector<1x256xf32>
    %c0_5 = arith.constant 0 : index
    %c0_6 = arith.constant 0 : index
    %23 = vector.load %arg7[%c0_5, %c0_6] : memref<1x256xf32, #tpu.memory_space<vmem>>, vector<1x256xf32>
    %c0_7 = arith.constant 0 : index
    %c0_8 = arith.constant 0 : index
    %c0_9 = arith.constant 0 : index
    %24 = vector.load %arg2[%c0_7, %c0_8, %c0_9] : memref<1x8x256xf32, #tpu.memory_space<vmem>>, vector<1x8x256xf32>
    %25 = vector.shape_cast %24 : vector<1x8x256xf32> to vector<8x256xf32>
    %cst = arith.constant dense<0xFF800000> : vector<256xf32>
    %26 = vector.multi_reduction <maximumf>, %25, %cst [0] : vector<8x256xf32> to vector<256xf32>
    %27 = vector.shape_cast %26 : vector<256xf32> to vector<1x256xf32>
    %28 = vector.broadcast %27 : vector<1x256xf32> to vector<8x256xf32>
    %29 = arith.subf %25, %28 : vector<8x256xf32>
    %30 = math.exp %29 : vector<8x256xf32>
    %cst_10 = arith.constant dense<0.000000e+00> : vector<256xf32>
    %31 = vector.multi_reduction <add>, %30, %cst_10 [0] : vector<8x256xf32> to vector<256xf32>
    %32 = vector.shape_cast %31 : vector<256xf32> to vector<1x256xf32>
    %33 = math.log %32 : vector<1x256xf32>
    %34 = arith.addf %33, %27 : vector<1x256xf32>
    %cst_11 = arith.constant 0.000000e+00 : f32
    %35 = vector.broadcast %cst_11 : f32 to vector<8x256xf32>
    %36 = arith.select %20, %25, %35 : vector<8x256xi1>, vector<8x256xf32>
    %cst_12 = arith.constant dense<0.000000e+00> : vector<256xf32>
    %37 = vector.multi_reduction <add>, %36, %cst_12 [0] : vector<8x256xf32> to vector<256xf32>
    %38 = vector.shape_cast %37 : vector<256xf32> to vector<1x256xf32>
    %39 = arith.subf %34, %38 : vector<1x256xf32>
    %cst_13 = arith.constant 0.000000e+00 : f32
    %40 = vector.broadcast %cst_13 : f32 to vector<1x256xf32>
    %41 = arith.select %15, %39, %40 : vector<1x256xi1>, vector<1x256xf32>
    %cst_14 = arith.constant 1.000000e+00 : f32
    %42 = vector.broadcast %cst_14 : f32 to vector<1x256xf32>
    %43 = arith.mulf %42, %41 : vector<1x256xf32>
    %c0_15 = arith.constant 0 : index
    %c0_16 = arith.constant 0 : index
    %c0_17 = arith.constant 0 : index
    %44 = vector.load %arg3[%c0_15, %c0_16, %c0_17] : memref<1x8x256xf32, #tpu.memory_space<vmem>>, vector<1x8x256xf32>
    %45 = vector.shape_cast %44 : vector<1x8x256xf32> to vector<8x256xf32>
    %cst_18 = arith.constant dense<0xFF800000> : vector<256xf32>
    %46 = vector.multi_reduction <maximumf>, %45, %cst_18 [0] : vector<8x256xf32> to vector<256xf32>
    %47 = vector.shape_cast %46 : vector<256xf32> to vector<1x256xf32>
    %48 = vector.broadcast %47 : vector<1x256xf32> to vector<8x256xf32>
    %49 = arith.subf %45, %48 : vector<8x256xf32>
    %50 = math.exp %49 : vector<8x256xf32>
    %cst_19 = arith.constant dense<0.000000e+00> : vector<256xf32>
    %51 = vector.multi_reduction <add>, %50, %cst_19 [0] : vector<8x256xf32> to vector<256xf32>
    %52 = vector.shape_cast %51 : vector<256xf32> to vector<1x256xf32>
    %53 = math.log %52 : vector<1x256xf32>
    %54 = arith.addf %53, %47 : vector<1x256xf32>
    %cst_20 = arith.constant 0.000000e+00 : f32
    %55 = vector.broadcast %cst_20 : f32 to vector<8x256xf32>
    %56 = arith.select %20, %45, %55 : vector<8x256xi1>, vector<8x256xf32>
    %cst_21 = arith.constant dense<0.000000e+00> : vector<256xf32>
    %57 = vector.multi_reduction <add>, %56, %cst_21 [0] : vector<8x256xf32> to vector<256xf32>
    %58 = vector.shape_cast %57 : vector<256xf32> to vector<1x256xf32>
    %59 = arith.subf %54, %58 : vector<1x256xf32>
    %cst_22 = arith.constant 0.000000e+00 : f32
    %60 = vector.broadcast %cst_22 : f32 to vector<1x256xf32>
    %61 = arith.select %15, %59, %60 : vector<1x256xi1>, vector<1x256xf32>
    %cst_23 = arith.constant 4.000000e-01 : f32
    %62 = vector.broadcast %cst_23 : f32 to vector<1x256xf32>
    %63 = arith.mulf %62, %61 : vector<1x256xf32>
    %64 = arith.addf %43, %63 : vector<1x256xf32>
    %c0_24 = arith.constant 0 : index
    %c0_25 = arith.constant 0 : index
    %c0_26 = arith.constant 0 : index
    %65 = vector.load %arg4[%c0_24, %c0_25, %c0_26] : memref<1x8x256xf32, #tpu.memory_space<vmem>>, vector<1x8x256xf32>
    %66 = vector.shape_cast %65 : vector<1x8x256xf32> to vector<8x256xf32>
    %cst_27 = arith.constant dense<0xFF800000> : vector<256xf32>
    %67 = vector.multi_reduction <maximumf>, %66, %cst_27 [0] : vector<8x256xf32> to vector<256xf32>
    %68 = vector.shape_cast %67 : vector<256xf32> to vector<1x256xf32>
    %69 = vector.broadcast %68 : vector<1x256xf32> to vector<8x256xf32>
    %70 = arith.subf %66, %69 : vector<8x256xf32>
    %71 = math.exp %70 : vector<8x256xf32>
    %cst_28 = arith.constant dense<0.000000e+00> : vector<256xf32>
    %72 = vector.multi_reduction <add>, %71, %cst_28 [0] : vector<8x256xf32> to vector<256xf32>
    %73 = vector.shape_cast %72 : vector<256xf32> to vector<1x256xf32>
    %74 = math.log %73 : vector<1x256xf32>
    %75 = arith.addf %74, %68 : vector<1x256xf32>
    %cst_29 = arith.constant 0.000000e+00 : f32
    %76 = vector.broadcast %cst_29 : f32 to vector<8x256xf32>
    %77 = arith.select %20, %66, %76 : vector<8x256xi1>, vector<8x256xf32>
    %cst_30 = arith.constant dense<0.000000e+00> : vector<256xf32>
    %78 = vector.multi_reduction <add>, %77, %cst_30 [0] : vector<8x256xf32> to vector<256xf32>
    %79 = vector.shape_cast %78 : vector<256xf32> to vector<1x256xf32>
    %80 = arith.subf %75, %79 : vector<1x256xf32>
    %cst_31 = arith.constant 0.000000e+00 : f32
    %81 = vector.broadcast %cst_31 : f32 to vector<1x256xf32>
    %82 = arith.select %15, %80, %81 : vector<1x256xi1>, vector<1x256xf32>
    %cst_32 = arith.constant 4.000000e-01 : f32
    %83 = vector.broadcast %cst_32 : f32 to vector<1x256xf32>
    %84 = arith.mulf %83, %82 : vector<1x256xf32>
    %85 = arith.addf %64, %84 : vector<1x256xf32>
    %86 = arith.addf %23, %85 : vector<1x256xf32>
    %c0_33 = arith.constant 0 : index
    %c0_34 = arith.constant 0 : index
    %87 = vector.load %arg7[%c0_33, %c0_34] : memref<1x256xf32, #tpu.memory_space<vmem>>, vector<1x256xf32>
    tpu.vector_store %arg7[%c0_33, %c0_34], %86 {strides = array<i32>} : memref<1x256xf32, #tpu.memory_space<vmem>>, vector<1x256xf32>,
    %c0_35 = arith.constant 0 : index
    %c0_36 = arith.constant 0 : index
    %88 = vector.load %arg8[%c0_35, %c0_36] : memref<1x256xf32, #tpu.memory_space<vmem>>, vector<1x256xf32>
    %89 = arith.addf %88, %22 : vector<1x256xf32>
    %c0_37 = arith.constant 0 : index
    %c0_38 = arith.constant 0 : index
    %90 = vector.load %arg8[%c0_37, %c0_38] : memref<1x256xf32, #tpu.memory_space<vmem>>, vector<1x256xf32>
    tpu.vector_store %arg8[%c0_37, %c0_38], %89 {strides = array<i32>} : memref<1x256xf32, #tpu.memory_space<vmem>>, vector<1x256xf32>,
    %c1_i32_39 = arith.constant 1 : i32
    %91 = arith.cmpi eq, %1, %c1_i32_39 : i32
    %92 = arith.extui %91 : i1 to i32
    %c0_i32_40 = arith.constant 0 : i32
    %93 = arith.cmpi ne, %92, %c0_i32_40 : i32
    scf.if %93 {
      %c0_41 = arith.constant 0 : index
      %c0_42 = arith.constant 0 : index
      %94 = vector.load %arg7[%c0_41, %c0_42] : memref<1x256xf32, #tpu.memory_space<vmem>>, vector<1x256xf32>
      %95 = vector.shape_cast %94 : vector<1x256xf32> to vector<1x1x256xf32>
      %cst_43 = arith.constant dense<0.000000e+00> : vector<1xf32>
      %96 = vector.multi_reduction <add>, %95, %cst_43 [1, 2] : vector<1x1x256xf32> to vector<1xf32>
      %97 = vector.shape_cast %96 : vector<1xf32> to vector<1x1x1xf32>
      %98 = vector.extract %97[0, 0, 0] : f32 from vector<1x1x1xf32>
      %99 = vector.broadcast %98 : f32 to vector<1x1xf32>
      %c0_44 = arith.constant 0 : index
      %c0_45 = arith.constant 0 : index
      %100 = vector.load %arg8[%c0_44, %c0_45] : memref<1x256xf32, #tpu.memory_space<vmem>>, vector<1x256xf32>
      %101 = vector.shape_cast %100 : vector<1x256xf32> to vector<1x1x256xf32>
      %cst_46 = arith.constant dense<0.000000e+00> : vector<1xf32>
      %102 = vector.multi_reduction <add>, %101, %cst_46 [1, 2] : vector<1x1x256xf32> to vector<1xf32>
      %103 = vector.shape_cast %102 : vector<1xf32> to vector<1x1x1xf32>
      %104 = vector.extract %103[0, 0, 0] : f32 from vector<1x1x1xf32>
      %105 = vector.broadcast %104 : f32 to vector<1x1xf32>
      %106 = arith.divf %99, %105 : vector<1x1xf32>
      %c0_47 = arith.constant 0 : index
      %c0_48 = arith.constant 0 : index
      %107 = vector.load %arg6[%c0_47, %c0_48] : memref<1x1xf32, #tpu.memory_space<vmem>>, vector<1x1xf32>
      tpu.vector_store %arg6[%c0_47, %c0_48], %106 {strides = array<i32>} : memref<1x1xf32, #tpu.memory_space<vmem>>, vector<1x1xf32>,
    } else {
    }
    return
  }
  func.func @transform_0(%arg0: i32, %arg1: i32) -> (i32, i32, i32) {
    %c0_i32 = arith.constant 0 : i32
    %c0_i32_0 = arith.constant 0 : i32
    return %arg0, %c0_i32, %arg1 : i32, i32, i32
  }
  func.func @transform_1(%arg0: i32, %arg1: i32) -> (i32, i32, i32) {
    %c0_i32 = arith.constant 0 : i32
    %c0_i32_0 = arith.constant 0 : i32
    return %arg0, %c0_i32, %arg1 : i32, i32, i32
  }
  func.func @transform_2(%arg0: i32, %arg1: i32) -> (i32, i32, i32) {
    %c0_i32 = arith.constant 0 : i32
    %c0_i32_0 = arith.constant 0 : i32
    return %arg0, %c0_i32, %arg1 : i32, i32, i32
  }
  func.func @transform_3(%arg0: i32, %arg1: i32) -> (i32, i32, i32) {
    %c0_i32 = arith.constant 0 : i32
    %c0_i32_0 = arith.constant 0 : i32
    return %arg0, %c0_i32, %arg1 : i32, i32, i32
  }
  func.func @transform_4(%arg0: i32, %arg1: i32) -> (i32, i32) {
    %c0_i32 = arith.constant 0 : i32
    %c0_i32_0 = arith.constant 0 : i32
    %c0_i32_1 = arith.constant 0 : i32
    return %c0_i32, %c0_i32_0 : i32, i32
  }
}

</mosaic_0001>

<llo_original>
// kernel: tpu_custom_call.1
$region0: #{tpu_custom_call.1}
  #allocation0 [shape = 'u32[]', space=smem, size = 0x4, offset = 0x4, fixed_abs, tag = 'smem constant byte address 0x4 - core index']
  #allocation1 [shape = 'u32[144,128]{1,0:T(1,128)}', space=vmem, size = 0x12000, scoped, tag = 'internal scratch']
  #allocation2 [shape = 'f32[1,256]{1,0:T(1,128)}', space=vmem, size = 0x400, scoped, tag = 'scratch operand']
  #allocation3 [shape = 'f32[1,256]{1,0:T(1,128)}', space=vmem, size = 0x400, scoped, tag = 'scratch operand']
  %s0 = inlined_call_operand.hbm [shape: f32[2,8,256], index: 0, kind: input, shape index: {}]
  %s1 = inlined_call_operand.hbm [shape: f32[2,8,256], index: 1, kind: input, shape index: {}]
  %s2 = inlined_call_operand.hbm [shape: f32[2,8,256], index: 2, kind: input, shape index: {}]
  %s3 = inlined_call_operand.vmem [shape: s32[2,1,256], index: 3, kind: input, shape index: {}]
  %s4 = inlined_call_operand.hbm [shape: f32[1,1], index: 4, kind: output, shape index: {}]
  %s5 = sld [smem:[#allocation0]]
  $region69: #{tpu_custom_call.1} parent=0
    _
  %s7 = ssub.s32 1, %s5
  %s8 = scalar_select 0, %s7, %s5
  $region1: #{tpu_custom_call.1} parent=0
    #allocation4 [shape = 'u8[16384]{0}', space=vmem, size = 0x4000, scoped, tag = 'input window, operand 0']
    #allocation5 [shape = 's32[2]{0}', space=sflag, size = 0x8, scoped, tag = 'scoped memory for tpu_custom_call.1']
    #allocation6 [shape = 's32[2]{0}', space=sflag, size = 0x8, scoped, tag = 'scoped memory for tpu_custom_call.1']
    #allocation7 [shape = 'u8[16384]{0}', space=vmem, size = 0x4000, scoped, tag = 'input window, operand 1']
    #allocation8 [shape = 's32[2]{0}', space=sflag, size = 0x8, scoped, tag = 'scoped memory for tpu_custom_call.1']
    #allocation9 [shape = 'u8[16384]{0}', space=vmem, size = 0x4000, scoped, tag = 'input window, operand 2']
    #allocation10 [shape = 'u8[512]{0}', space=vmem, size = 0x400, scoped, tag = 'output window, operand 0, single buffered']
    %9 = vsyncpa [#allocation5], 0
    %s10 = scalar_lea.sflag [#allocation5], 1
    %11 = vsyncpa %s10, 0
    %12 = vsyncpa [#allocation8], 0
    %s13 = scalar_lea.sflag [#allocation8], 1
    %14 = vsyncpa %s13, 0
    %15 = vsyncpa [#allocation6], 0
    loop: start=0, step=1, limit=4
    $region2: #{tpu_custom_call.1} parent=1 // loop_pre_header
      _
    $region3: #{tpu_custom_call.1} parent=1 // loop_header
      %s17 = sphi 0, %s21
      %p18 = scmp.ge.s32.totalorder %s17, 4
      %s24 = sphi 0, %s36
      %s25 = sphi 0, %s32
      %s26 = sphi 0, %s24
      %s27 = sphi 0, %s25
      %s28 = sphi 0, %s26
      %s29 = sphi 0, %s27
      %s41 = sphi 0, %s43
      %s44 = sphi 0, %s41
      %s45 = sphi 0, %s44
      %s61 = sphi 0, %s45
      %s69 = sphi 0, %s71
      %s72 = sphi 0, %s69
      %s73 = sphi 0, %s72
      %s89 = sphi 0, %s73
      %s97 = sphi 0, %s99
      %s100 = sphi 0, %s97
      %s101 = sphi 0, %s100
      %s117 = sphi 0, %s101
      %s125 = sphi 0, %s127
      %s128 = sphi 0, %s125
      %s129 = sphi 0, %s128
      %s145 = sphi 0, %s129
      %s149 = sphi 0, %s149
      %s151 = sphi 0, %s149
      %s152 = sphi 0, %s151
      %s166 = sphi 0, %s152
    $region4: #{tpu_custom_call.1} parent=1 // loop_header_branch
      %20 = sbr.rel (%p18) target = $region8
    $region5: #{tpu_custom_call.1} parent=1 // loop_body
      %s22 = ssub.s32 %s17, 1
      %s23 = ssub.s32 %s17, 2
      %s30 = sadd.s32 1, %s25
      %p31 = scmp.ge.s32.totalorder %s30, 1
      %s32 = scalar_select %p31, 0, %s30
      %s33 = sadd.s32 1, %s24
      %s34 = scalar_select %p31, %s33, %s24
      %p35 = scmp.ge.s32.totalorder %s34, 2
      %s36 = scalar_select %p35, 0, %s34
      %s37 = ssub.s32 %s24, %s36
      %s38 = ssub.s32 %s25, %s32
      %s39 = sor.u32 %s37, %s38
      %p40 = scmp.eq.s32.totalorder %s39, 0
      %s42 = sadd.s32 %s41, 1
      %s43 = scalar_select %p40, %s41, %s42
      %p46 = pneg %p40
      %p47 = scmp.eq.s32.totalorder %s17, 1
      %p48 = por %p46, %p47
      %p49 = scmp.ne.s32.totalorder %s41, %s44
      %p50 = scmp.eq.s32.totalorder %s17, 0
      %p51 = por %p49, %p50
      %p52 = scmp.ne.s32.totalorder %s41, %s44
      %p53 = scmp.eq.s32.totalorder %s22, 1
      %p54 = por %p52, %p53
      %p55 = scmp.ne.s32.totalorder %s44, %s45
      %p56 = scmp.eq.s32.totalorder %s22, 0
      %p57 = por %p55, %p56
      %p58 = scmp.ne.s32.totalorder %s44, %s45
      %p59 = scmp.eq.s32.totalorder %s23, 1
      %p60 = por %p58, %p59
      %p62 = scmp.ne.s32.totalorder %s45, %s61
      %p63 = scmp.eq.s32.totalorder %s23, 0
      %p64 = por %p62, %p63
      %s65 = ssub.s32 %s24, %s36
      %s66 = ssub.s32 %s25, %s32
      %s67 = sor.u32 %s65, %s66
      %p68 = scmp.eq.s32.totalorder %s67, 0
      %s70 = sadd.s32 %s69, 1
      %s71 = scalar_select %p68, %s69, %s70
      %p74 = pneg %p68
      %p75 = scmp.eq.s32.totalorder %s17, 1
      %p76 = por %p74, %p75
      %p77 = scmp.ne.s32.totalorder %s69, %s72
      %p78 = scmp.eq.s32.totalorder %s17, 0
      %p79 = por %p77, %p78
      %p80 = scmp.ne.s32.totalorder %s69, %s72
      %p81 = scmp.eq.s32.totalorder %s22, 1
      %p82 = por %p80, %p81
      %p83 = scmp.ne.s32.totalorder %s72, %s73
      %p84 = scmp.eq.s32.totalorder %s22, 0
      %p85 = por %p83, %p84
      %p86 = scmp.ne.s32.totalorder %s72, %s73
      %p87 = scmp.eq.s32.totalorder %s23, 1
      %p88 = por %p86, %p87
      %p90 = scmp.ne.s32.totalorder %s73, %s89
      %p91 = scmp.eq.s32.totalorder %s23, 0
      %p92 = por %p90, %p91
      %s93 = ssub.s32 %s24, %s36
      %s94 = ssub.s32 %s25, %s32
      %s95 = sor.u32 %s93, %s94
      %p96 = scmp.eq.s32.totalorder %s95, 0
      %s98 = sadd.s32 %s97, 1
      %s99 = scalar_select %p96, %s97, %s98
      %p102 = pneg %p96
      %p103 = scmp.eq.s32.totalorder %s17, 1
      %p104 = por %p102, %p103
      %p105 = scmp.ne.s32.totalorder %s97, %s100
      %p106 = scmp.eq.s32.totalorder %s17, 0
      %p107 = por %p105, %p106
      %p108 = scmp.ne.s32.totalorder %s97, %s100
      %p109 = scmp.eq.s32.totalorder %s22, 1
      %p110 = por %p108, %p109
      %p111 = scmp.ne.s32.totalorder %s100, %s101
      %p112 = scmp.eq.s32.totalorder %s22, 0
      %p113 = por %p111, %p112
      %p114 = scmp.ne.s32.totalorder %s100, %s101
      %p115 = scmp.eq.s32.totalorder %s23, 1
      %p116 = por %p114, %p115
      %p118 = scmp.ne.s32.totalorder %s101, %s117
      %p119 = scmp.eq.s32.totalorder %s23, 0
      %p120 = por %p118, %p119
      %s121 = ssub.s32 %s24, %s36
      %s122 = ssub.s32 %s25, %s32
      %s123 = sor.u32 %s121, %s122
      %p124 = scmp.eq.s32.totalorder %s123, 0
      %s126 = sadd.s32 %s125, 1
      %s127 = scalar_select %p124, %s125, %s126
      %p130 = pneg %p124
      %p131 = scmp.eq.s32.totalorder %s17, 1
      %p132 = por %p130, %p131
      %p133 = scmp.ne.s32.totalorder %s125, %s128
      %p134 = scmp.eq.s32.totalorder %s17, 0
      %p135 = por %p133, %p134
      %p136 = scmp.ne.s32.totalorder %s125, %s128
      %p137 = scmp.eq.s32.totalorder %s22, 1
      %p138 = por %p136, %p137
      %p139 = scmp.ne.s32.totalorder %s128, %s129
      %p140 = scmp.eq.s32.totalorder %s22, 0
      %p141 = por %p139, %p140
      %p142 = scmp.ne.s32.totalorder %s128, %s129
      %p143 = scmp.eq.s32.totalorder %s23, 1
      %p144 = por %p142, %p143
      %p146 = scmp.ne.s32.totalorder %s129, %s145
      %p147 = scmp.eq.s32.totalorder %s23, 0
      %p148 = por %p146, %p147
      %s150 = sadd.s32 %s149, 1
      %p153 = scmp.eq.s32.totalorder %s17, 1
      %p154 = scmp.ne.s32.totalorder %s149, %s151
      %p155 = scmp.eq.s32.totalorder %s17, 0
      %p156 = por %p154, %p155
      %p157 = scmp.ne.s32.totalorder %s149, %s151
      %p158 = scmp.eq.s32.totalorder %s22, 1
      %p159 = por %p157, %p158
      %p160 = scmp.ne.s32.totalorder %s151, %s152
      %p161 = scmp.eq.s32.totalorder %s22, 0
      %p162 = por %p160, %p161
      %p163 = scmp.ne.s32.totalorder %s151, %s152
      %p164 = scmp.eq.s32.totalorder %s23, 1
      %p165 = por %p163, %p164
      %p167 = scmp.ne.s32.totalorder %s152, %s166
      %p168 = scmp.eq.s32.totalorder %s23, 0
      %p169 = por %p167, %p168
      %p170 = scmp.le.s32.totalorder 1, %s17
      %p171 = scmp.lt.s32.totalorder %s17, 3
      %p172 = pnand %p170, %p171
      %p173 = pneg %p172
      // Predicated region
      $region9: #{tpu_custom_call.1} parent=5 // pred_check
        _
      $region10: #{tpu_custom_call.1} parent=5 // pred_check_branch
        %175 = sbr.rel (%p172) target = $region12
      $region11: #{tpu_custom_call.1} parent=5 // pred_region
        %s176 = ssub.s32 %s17, 1
      $region12: #{tpu_custom_call.1} parent=5 // pred_fallthru
        _
      %p177 = scmp.lt.s32.totalorder %s17, 2
      // Predicated region
      $region13: #{tpu_custom_call.1} parent=5 // pred_check
        %p178 = pneg %p177
      $region14: #{tpu_custom_call.1} parent=5 // pred_check_branch
        %180 = sbr.rel (%p178) target = $region16
      $region15: #{tpu_custom_call.1} parent=5 // pred_region
        // Predicated region
        $region17: #{tpu_custom_call.1} parent=15 // pred_check
          %p181 = pneg %p51
        $region18: #{tpu_custom_call.1} parent=15 // pred_check_branch
          %183 = sbr.rel (%p181) target = $region20
        $region19: #{tpu_custom_call.1} parent=15 // pred_region
          %s184 = sand.u32 %s41, 1
          %s185 = scalar_lea.sflag [#allocation5], %s184
          %s186 = sand.u32 %s41, 1
          %s187 = smul.addr %s186, 16
          %s188 = scalar_lea.vmem [#allocation4], %s187
          %s189 = smul.u32 2, %s25
          %s191 = ssub.s32 256, 256
          %192 = vsyncadd %s185, %s191
          %s193 = smul.addr %s24, 2
          %s194 = sadd.s32 %s189, %s193
          %s195 = smul.addr %s194, 128
          %s196 = scalar_lea.hbm %s0, %s195
          %s198 = sshll.u32 %s188, 4
          %s199 = int_to_ptr.vmem [resolvable:$true] %s198
          %201 = dma.hbm_to_vmem [thread:$0]  %s196, 256, %s199, %s185
        $region20: #{tpu_custom_call.1} parent=15 // pred_fallthru
          _
        // Predicated region
        $region21: #{tpu_custom_call.1} parent=15 // pred_check
          %p202 = pneg %p79
        $region22: #{tpu_custom_call.1} parent=15 // pred_check_branch
          %204 = sbr.rel (%p202) target = $region24
        $region23: #{tpu_custom_call.1} parent=15 // pred_region
          %s205 = sand.u32 %s17, 1
          %s206 = scalar_lea.sflag [#allocation8], %s205
          %s207 = sand.u32 %s69, 1
          %s208 = smul.addr %s207, 16
          %s209 = scalar_lea.vmem [#allocation7], %s208
          %s210 = smul.u32 2, %s25
          %s212 = ssub.s32 256, 256
          %213 = vsyncadd %s206, %s212
          %s214 = smul.addr %s24, 2
          %s215 = sadd.s32 %s210, %s214
          %s216 = smul.addr %s215, 128
          %s217 = scalar_lea.hbm %s1, %s216
          %s219 = sshll.u32 %s209, 4
          %s220 = int_to_ptr.vmem [resolvable:$true] %s219
          %222 = dma.hbm_to_vmem [thread:$0]  %s217, 256, %s220, %s206
        $region24: #{tpu_custom_call.1} parent=15 // pred_fallthru
          _
        // Predicated region
        $region25: #{tpu_custom_call.1} parent=15 // pred_check
          %p223 = pneg %p107
        $region26: #{tpu_custom_call.1} parent=15 // pred_check_branch
          %225 = sbr.rel (%p223) target = $region28
        $region27: #{tpu_custom_call.1} parent=15 // pred_region
          %s226 = sand.u32 %s17, 1
          %s227 = scalar_lea.sflag [#allocation8], %s226
          %s228 = sand.u32 %s97, 1
          %s229 = smul.addr %s228, 16
          %s230 = scalar_lea.vmem [#allocation9], %s229
          %s231 = smul.u32 2, %s25
          %s233 = ssub.s32 256, 256
          %234 = vsyncadd %s227, %s233
          %s235 = smul.addr %s24, 2
          %s236 = sadd.s32 %s231, %s235
          %s237 = smul.addr %s236, 128
          %s238 = scalar_lea.hbm %s2, %s237
          %s240 = sshll.u32 %s230, 4
          %s241 = int_to_ptr.vmem [resolvable:$true] %s240
          %243 = dma.hbm_to_vmem [thread:$0]  %s238, 256, %s241, %s227
        $region28: #{tpu_custom_call.1} parent=15 // pred_fallthru
          _
        // Predicated region
        $region29: #{tpu_custom_call.1} parent=15 // pred_check
          %p244 = pneg %p135
        $region30: #{tpu_custom_call.1} parent=15 // pred_check_branch
          %246 = sbr.rel (%p244) target = $region32
        $region31: #{tpu_custom_call.1} parent=15 // pred_region
          %s247 = smul.u32 2, %s25
          %p248 = scmp.lt.s32.totalorder %s24, 1
          %s249 = scalar_select %p248, %s24, 1
          %p250 = scmp.lt.s32.totalorder %s247, 1
          %s251 = scalar_select %p250, %s247, 1
          %s252 = smul.addr %s249, 2
          %s253 = sadd.s32 %s251, %s252
          %s254 = scalar_lea.vmem %s3, %s253
          %s255 = smul.u32 2, %s25
        $region32: #{tpu_custom_call.1} parent=15 // pred_fallthru
          _
      $region16: #{tpu_custom_call.1} parent=5 // pred_fallthru
        _
      %p256 = scmp.le.s32.totalorder 1, %s17
      %p257 = scmp.lt.s32.totalorder %s17, 3
      %p258 = pnand %p256, %p257
      %p259 = pneg %p258
      // Predicated region
      $region33: #{tpu_custom_call.1} parent=5 // pred_check
        _
      $region34: #{tpu_custom_call.1} parent=5 // pred_check_branch
        %261 = sbr.rel (%p258) target = $region36
      $region35: #{tpu_custom_call.1} parent=5 // pred_region
        %s262 = ssub.s32 %s17, 1
        %s263 = sand.u32 %s44, 1
        %s264 = scalar_lea.sflag [#allocation5], %s263
        %s265 = sand.u32 %s44, 1
        %s266 = smul.addr %s265, 16
        %s267 = scalar_lea.vmem [#allocation4], %s266
        // Predicated region
        $region37: #{tpu_custom_call.1} parent=35 // pred_check
          %p268 = pneg %p57
        $region38: #{tpu_custom_call.1} parent=35 // pred_check_branch
          %270 = sbr.rel (%p268) target = $region40
        $region39: #{tpu_custom_call.1} parent=35 // pred_region
          %271 = dma.done %s264, 256
        $region40: #{tpu_custom_call.1} parent=35 // pred_fallthru
          _
        %s272 = sand.u32 %s22, 1
        %s273 = scalar_lea.sflag [#allocation8], %s272
        %s274 = sand.u32 %s72, 1
        %s275 = smul.addr %s274, 16
        %s276 = scalar_lea.vmem [#allocation7], %s275
        // Predicated region
        $region41: #{tpu_custom_call.1} parent=35 // pred_check
          %p277 = pneg %p85
        $region42: #{tpu_custom_call.1} parent=35 // pred_check_branch
          %279 = sbr.rel (%p277) target = $region44
        $region43: #{tpu_custom_call.1} parent=35 // pred_region
          %280 = dma.done %s273, 256
        $region44: #{tpu_custom_call.1} parent=35 // pred_fallthru
          _
        %s281 = sand.u32 %s22, 1
        %s282 = scalar_lea.sflag [#allocation8], %s281
        %s283 = sand.u32 %s100, 1
        %s284 = smul.addr %s283, 16
        %s285 = scalar_lea.vmem [#allocation9], %s284
        // Predicated region
        $region45: #{tpu_custom_call.1} parent=35 // pred_check
          %p286 = pneg %p113
        $region46: #{tpu_custom_call.1} parent=35 // pred_check_branch
          %288 = sbr.rel (%p286) target = $region48
        $region47: #{tpu_custom_call.1} parent=35 // pred_region
          %289 = dma.done %s282, 256
        $region48: #{tpu_custom_call.1} parent=35 // pred_fallthru
          _
        %s290 = sand.u32 %s44, 1
        %s291 = scalar_lea.sflag [#allocation5], %s290
        %s292 = sand.u32 %s44, 1
        %s293 = smul.addr %s292, 16
        %s294 = scalar_lea.vmem [#allocation4], %s293
        %p295 = pneg %p57
        %p296 = pneg %p54
        %s297 = sand.u32 %s22, 1
        %s298 = scalar_lea.sflag [#allocation8], %s297
        %s299 = sand.u32 %s72, 1
        %s300 = smul.addr %s299, 16
        %s301 = scalar_lea.vmem [#allocation7], %s300
        %p302 = pneg %p85
        %p303 = pneg %p82
        %s304 = sand.u32 %s22, 1
        %s305 = scalar_lea.sflag [#allocation8], %s304
        %s306 = sand.u32 %s100, 1
        %s307 = smul.addr %s306, 16
        %s308 = scalar_lea.vmem [#allocation9], %s307
        %p309 = pneg %p113
        %p310 = pneg %p110
        %s311 = smul.u32 2, %s27
        %p312 = scmp.lt.s32.totalorder %s26, 1
        %s313 = scalar_select %p312, %s26, 1
        %p314 = scmp.lt.s32.totalorder %s311, 1
        %s315 = scalar_select %p314, %s311, 1
        %s316 = smul.addr %s313, 2
        %s317 = sadd.s32 %s315, %s316
        %s318 = scalar_lea.vmem %s3, %s317
        %p319 = pneg %p141
        %p320 = pneg %p138
        %p321 = pneg %p162
        %p322 = pneg %p159
        %s323 = smul.u32 2, %s27
        %s324 = smul.u32 2, %s27
        %s325 = smul.u32 2, %s27
        %s326 = smul.u32 2, %s27
        %p327 = scmp.lt.s32.totalorder %s26, 1
        %s328 = scalar_select %p327, %s26, 1
        %p329 = scmp.lt.s32.totalorder %s326, 1
        %s330 = scalar_select %p329, %s326, 1
        %s331 = smul.addr %s328, 2
        %s332 = sadd.s32 %s330, %s331
        %s333 = scalar_lea.vmem %s3, %s332
        %s334 = smul.u32 2, %s27
        %s335 = sadd.s32 %s26, %s27
        %p336 = scmp.eq.s32.totalorder %s335, 0
        // Predicated region
        $region49: #{tpu_custom_call.1} parent=35 // pred_check
          %p337 = pneg %p336
        $region50: #{tpu_custom_call.1} parent=35 // pred_check_branch
          %339 = sbr.rel (%p337) target = $region52
        $region51: #{tpu_custom_call.1} parent=35 // pred_region
          %v340 = vlaneseq
          %vm341 = vcmp.ge.s32.totalorder %v340, 0
          %vm342 = vcmp.lt.s32.totalorder %v340, 256
          %vm343 = vmand %vm341, %vm342
          %344 = vst.msk [vmem:[#allocation2] sm:$0x3] %vm343, 0.0
          %345 = vst.msk [vmem:[#allocation3] sm:$0x3] %vm343, 0.0
        $region52: #{tpu_custom_call.1} parent=35 // pred_fallthru
          _
        %v346 = vld [vmem:[%s333] sm:$0x3]
        %v347 = vlaneseq
        %v348 = vand.u32 %v347, 127
        %v349 = vadd.s32 %v348, 128
        %s350 = smul.u32 %s27, 256
        %v351 = vstv %s350
        %v352 = vadd.s32 %v351, %v348
        %v353 = vadd.s32 %v351, %v349
        %vm354 = vcmp.lt.s32.totalorder %v352, 256
        %vm355 = vcmp.lt.s32.totalorder %v353, 256
        %vm356 = vcmp.ne.s32.totalorder %v346, 255
        %v357 = vsel %vm354, 1, 0
        %v358 = vsel %vm355, 1, 0
        %v359 = vcombine.low %v357, %v358
        %v361 = vunpack.c.l.s4 1966171168
        %v362 = vunpack.c.0.s8 %v361
        %v363 = vlaneseq
        %v364 = vshrl.u32 %v363, 7
        %v365 = vsub.s32 %v362, %v364
        %v366 = vrot.slane %v359, %v365
        %v368 = vunpack.c.l.s4 1966171168
        %v369 = vunpack.c.0.s8 %v368
        %v370 = vlaneseq
        %v371 = vshrl.u32 %v370, 7
        %v372 = vsub.s32 %v369, %v371
        %v373 = vrot.slane %v366, %v372
        %vm374 = vcmp.ne.s32.totalorder %v373, 0
        %vm375 = vmand %vm356, %vm374
        %v376 = vsel %vm375, %v346, 0
        %v377 = vlaneseq
        %v378 = vshrl.u32 %v377, 7
        %v379 = vlaneseq
        %v380 = vshrl.u32 %v379, 7
        %v381 = vsub.s32 0, %v380
        %v382 = vrot.slane %v376, %v381
        %v383 = vlaneseq
        %v384 = vshrl.u32 %v383, 7
        %v385 = vsub.s32 1, %v384
        %v386 = vrot.slane %v376, %v385
        %vm387 = vcmp.eq.s32.totalorder %v378, %v382
        %vm388 = vcmp.eq.s32.totalorder %v378, %v386
        %v389 = vsel %vm375, 1, 0
        %v390 = vcvt.s32.f32 %v389
        %v391 = vld [vmem:[#allocation2] sm:$0x3]
        %v392 = vld [vmem:[%s267] sm:$0xff]
        %v393 = vld [vmem:[%s267 + $0x8] sm:$0xff]
        %v394 = vrot.slane %v392, 4
        %v395 = vmax.f32 %v392, %v394
        %v396 = vrot.slane %v395, 2
        %v397 = vmax.f32 %v395, %v396
        %v398 = vrot.slane %v397, 1
        %v399 = vmax.f32 %v397, %v398
        %v400 = vrot.slane %v393, 4
        %v401 = vmax.f32 %v393, %v400
        %v402 = vrot.slane %v401, 2
        %v403 = vmax.f32 %v401, %v402
        %v404 = vrot.slane %v403, 1
        %v405 = vmax.f32 %v403, %v404
        %v406 = vsub.f32 %v392, %v399
        %v407 = vsub.f32 %v393, %v405
        %v408 = vmul.f32 %v406, 1.442695
        %v409 = vpow.pop %v408
        %v410 = vmul.f32 %v407, 1.442695
        %v411 = vpow.pop %v410
        %v412 = vrot.slane %v409, 4
        %v413 = vadd.f32 %v409, %v412
        %v414 = vrot.slane %v413, 2
        %v415 = vadd.f32 %v413, %v414
        %v416 = vrot.slane %v415, 1
        %v417 = vadd.f32 %v415, %v416
        %v418 = vrot.slane %v411, 4
        %v419 = vadd.f32 %v411, %v418
        %v420 = vrot.slane %v419, 2
        %v421 = vadd.f32 %v419, %v420
        %v422 = vrot.slane %v421, 1
        %v423 = vadd.f32 %v421, %v422
        %v424 = vlog2.pop %v417
        %v425 = vmul.f32 %v424, 0.6931472
        %v426 = vlog2.pop %v423
        %v427 = vmul.f32 %v426, 0.6931472
        %v428 = vadd.f32 %v425, %v399
        %v429 = vadd.f32 %v427, %v405
        %v430 = vsel %vm387, %v392, 0.0
        %v431 = vsel %vm388, %v393, 0.0
        %v432 = vrot.slane %v430, 4
        %v433 = vadd.f32 %v430, %v432
        %v434 = vrot.slane %v433, 2
        %v435 = vadd.f32 %v433, %v434
        %v436 = vrot.slane %v435, 1
        %v437 = vadd.f32 %v435, %v436
        %v438 = vrot.slane %v431, 4
        %v439 = vadd.f32 %v431, %v438
        %v440 = vrot.slane %v439, 2
        %v441 = vadd.f32 %v439, %v440
        %v442 = vrot.slane %v441, 1
        %v443 = vadd.f32 %v441, %v442
        %v444 = vsub.f32 %v428, %v437
        %v445 = vsub.f32 %v429, %v443
        %v448 = vcombine.low %v444, %v445
        %v450 = vunpack.c.l.s4 1966171168
        %v451 = vunpack.c.0.s8 %v450
        %v452 = vlaneseq
        %v453 = vshrl.u32 %v452, 7
        %v454 = vsub.s32 %v451, %v453
        %v455 = vrot.slane %v448, %v454
        %v457 = vunpack.c.l.s4 1966171168
        %v458 = vunpack.c.0.s8 %v457
        %v459 = vlaneseq
        %v460 = vshrl.u32 %v459, 7
        %v461 = vsub.s32 %v458, %v460
        %v462 = vrot.slane %v455, %v461
        %v464 = vsel %vm375, %v462, 0.0
        %v465 = vld [vmem:[%s276] sm:$0xff]
        %v466 = vld [vmem:[%s276 + $0x8] sm:$0xff]
        %v467 = vrot.slane %v465, 4
        %v468 = vmax.f32 %v465, %v467
        %v469 = vrot.slane %v468, 2
        %v470 = vmax.f32 %v468, %v469
        %v471 = vrot.slane %v470, 1
        %v472 = vmax.f32 %v470, %v471
        %v473 = vrot.slane %v466, 4
        %v474 = vmax.f32 %v466, %v473
        %v475 = vrot.slane %v474, 2
        %v476 = vmax.f32 %v474, %v475
        %v477 = vrot.slane %v476, 1
        %v478 = vmax.f32 %v476, %v477
        %v479 = vsub.f32 %v465, %v472
        %v480 = vsub.f32 %v466, %v478
        %v481 = vmul.f32 %v479, 1.442695
        %v482 = vpow.pop %v481
        %v483 = vmul.f32 %v480, 1.442695
        %v484 = vpow.pop %v483
        %v485 = vrot.slane %v482, 4
        %v486 = vadd.f32 %v482, %v485
        %v487 = vrot.slane %v486, 2
        %v488 = vadd.f32 %v486, %v487
        %v489 = vrot.slane %v488, 1
        %v490 = vadd.f32 %v488, %v489
        %v491 = vrot.slane %v484, 4
        %v492 = vadd.f32 %v484, %v491
        %v493 = vrot.slane %v492, 2
        %v494 = vadd.f32 %v492, %v493
        %v495 = vrot.slane %v494, 1
        %v496 = vadd.f32 %v494, %v495
        %v497 = vlog2.pop %v490
        %v498 = vmul.f32 %v497, 0.6931472
        %v499 = vlog2.pop %v496
        %v500 = vmul.f32 %v499, 0.6931472
        %v501 = vadd.f32 %v498, %v472
        %v502 = vadd.f32 %v500, %v478
        %v503 = vsel %vm387, %v465, 0.0
        %v504 = vsel %vm388, %v466, 0.0
        %v505 = vrot.slane %v503, 4
        %v506 = vadd.f32 %v503, %v505
        %v507 = vrot.slane %v506, 2
        %v508 = vadd.f32 %v506, %v507
        %v509 = vrot.slane %v508, 1
        %v510 = vadd.f32 %v508, %v509
        %v511 = vrot.slane %v504, 4
        %v512 = vadd.f32 %v504, %v511
        %v513 = vrot.slane %v512, 2
        %v514 = vadd.f32 %v512, %v513
        %v515 = vrot.slane %v514, 1
        %v516 = vadd.f32 %v514, %v515
        %v517 = vsub.f32 %v501, %v510
        %v518 = vsub.f32 %v502, %v516
        %v521 = vcombine.low %v517, %v518
        %v523 = vunpack.c.l.s4 1966171168
        %v524 = vunpack.c.0.s8 %v523
        %v525 = vlaneseq
        %v526 = vshrl.u32 %v525, 7
        %v527 = vsub.s32 %v524, %v526
        %v528 = vrot.slane %v521, %v527
        %v530 = vunpack.c.l.s4 1966171168
        %v531 = vunpack.c.0.s8 %v530
        %v532 = vlaneseq
        %v533 = vshrl.u32 %v532, 7
        %v534 = vsub.s32 %v531, %v533
        %v535 = vrot.slane %v528, %v534
        %v537 = vsel %vm375, %v535, 0.0
        %v538 = vmul.f32 %v537, 0.4
        %v539 = vadd.f32 %v464, %v538
        %v540 = vld [vmem:[%s285] sm:$0xff]
        %v541 = vld [vmem:[%s285 + $0x8] sm:$0xff]
        %v542 = vrot.slane %v540, 4
        %v543 = vmax.f32 %v540, %v542
        %v544 = vrot.slane %v543, 2
        %v545 = vmax.f32 %v543, %v544
        %v546 = vrot.slane %v545, 1
        %v547 = vmax.f32 %v545, %v546
        %v548 = vrot.slane %v541, 4
        %v549 = vmax.f32 %v541, %v548
        %v550 = vrot.slane %v549, 2
        %v551 = vmax.f32 %v549, %v550
        %v552 = vrot.slane %v551, 1
        %v553 = vmax.f32 %v551, %v552
        %v554 = vsub.f32 %v540, %v547
        %v555 = vsub.f32 %v541, %v553
        %v556 = vmul.f32 %v554, 1.442695
        %v557 = vpow.pop %v556
        %v558 = vmul.f32 %v555, 1.442695
        %v559 = vpow.pop %v558
        %v560 = vrot.slane %v557, 4
        %v561 = vadd.f32 %v557, %v560
        %v562 = vrot.slane %v561, 2
        %v563 = vadd.f32 %v561, %v562
        %v564 = vrot.slane %v563, 1
        %v565 = vadd.f32 %v563, %v564
        %v566 = vrot.slane %v559, 4
        %v567 = vadd.f32 %v559, %v566
        %v568 = vrot.slane %v567, 2
        %v569 = vadd.f32 %v567, %v568
        %v570 = vrot.slane %v569, 1
        %v571 = vadd.f32 %v569, %v570
        %v572 = vlog2.pop %v565
        %v573 = vmul.f32 %v572, 0.6931472
        %v574 = vlog2.pop %v571
        %v575 = vmul.f32 %v574, 0.6931472
        %v576 = vadd.f32 %v573, %v547
        %v577 = vadd.f32 %v575, %v553
        %v578 = vsel %vm387, %v540, 0.0
        %v579 = vsel %vm388, %v541, 0.0
        %v580 = vrot.slane %v578, 4
        %v581 = vadd.f32 %v578, %v580
        %v582 = vrot.slane %v581, 2
        %v583 = vadd.f32 %v581, %v582
        %v584 = vrot.slane %v583, 1
        %v585 = vadd.f32 %v583, %v584
        %v586 = vrot.slane %v579, 4
        %v587 = vadd.f32 %v579, %v586
        %v588 = vrot.slane %v587, 2
        %v589 = vadd.f32 %v587, %v588
        %v590 = vrot.slane %v589, 1
        %v591 = vadd.f32 %v589, %v590
        %v592 = vsub.f32 %v576, %v585
        %v593 = vsub.f32 %v577, %v591
        %v596 = vcombine.low %v592, %v593
        %v598 = vunpack.c.l.s4 1966171168
        %v599 = vunpack.c.0.s8 %v598
        %v600 = vlaneseq
        %v601 = vshrl.u32 %v600, 7
        %v602 = vsub.s32 %v599, %v601
        %v603 = vrot.slane %v596, %v602
        %v605 = vunpack.c.l.s4 1966171168
        %v606 = vunpack.c.0.s8 %v605
        %v607 = vlaneseq
        %v608 = vshrl.u32 %v607, 7
        %v609 = vsub.s32 %v606, %v608
        %v610 = vrot.slane %v603, %v609
        %v612 = vsel %vm375, %v610, 0.0
        %v613 = vmul.f32 %v612, 0.4
        %v614 = vadd.f32 %v539, %v613
        %v615 = vadd.f32 %v391, %v614
        %v616 = vlaneseq
        %vm617 = vcmp.ge.s32.totalorder %v616, 0
        %vm618 = vcmp.lt.s32.totalorder %v616, 256
        %vm619 = vmand %vm617, %vm618
        %620 = vst.msk [vmem:[#allocation2] sm:$0x3] %vm619, %v615
        %v621 = vld [vmem:[#allocation3] sm:$0x3]
        %v622 = vadd.f32 %v621, %v390
        %623 = vst.msk [vmem:[#allocation3] sm:$0x3] %vm619, %v622
        %p624 = scmp.eq.s32.totalorder %s335, 1
        // Predicated region
        $region53: #{tpu_custom_call.1} parent=35 // pred_check
          %p625 = pneg %p624
        $region54: #{tpu_custom_call.1} parent=35 // pred_check_branch
          %627 = sbr.rel (%p625) target = $region56
        $region55: #{tpu_custom_call.1} parent=35 // pred_region
          %v628 = vld [vmem:[#allocation2] sm:$0x3]
          %v630 = vlaneseq
          %v631 = vshrl.u32 %v630, 7
          %v632 = vsub.s32 0, %v631
          %v633 = vrot.slane %v628, %v632
          %v634 = vlaneseq
          %v635 = vshrl.u32 %v634, 7
          %v636 = vsub.s32 1, %v635
          %v637 = vrot.slane %v628, %v636
          %vm640 = vcmask 1040384
          %v641 = vsel %vm640, %v633, 0.0
          %v642 = vsel %vm640, %v637, 0.0
          %v643 = vadd.f32 %v641, %v642
          %644 = vadd.xlane.f32.xlu0 %v643
          %v645 = vpop.xlane.xlu0 %644
          %v646 = vrot.slane %v645, 4
          %v647 = vadd.f32 %v645, %v646
          %v648 = vrot.slane %v647, 2
          %v649 = vadd.f32 %v647, %v648
          %v650 = vrot.slane %v649, 1
          %v651 = vadd.f32 %v649, %v650
          %s652 = vtos %v651
          %v653 = vstv %s652
          %v654 = vld [vmem:[#allocation3] sm:$0x3]
          %v656 = vlaneseq
          %v657 = vshrl.u32 %v656, 7
          %v658 = vsub.s32 0, %v657
          %v659 = vrot.slane %v654, %v658
          %v660 = vlaneseq
          %v661 = vshrl.u32 %v660, 7
          %v662 = vsub.s32 1, %v661
          %v663 = vrot.slane %v654, %v662
          %v666 = vsel %vm640, %v659, 0.0
          %v667 = vsel %vm640, %v663, 0.0
          %v668 = vadd.f32 %v666, %v667
          %669 = vadd.xlane.f32.xlu0 %v668
          %v670 = vpop.xlane.xlu0 %669
          %v671 = vrot.slane %v670, 4
          %v672 = vadd.f32 %v670, %v671
          %v673 = vrot.slane %v672, 2
          %v674 = vadd.f32 %v672, %v673
          %v675 = vrot.slane %v674, 1
          %v676 = vadd.f32 %v674, %v675
          %s677 = vtos %v676
          %v678 = vstv %s677
          %v679 = vrcp.pop %v678
          %v680 = vmul.f32 %v653, %v679
          %vm681 = vcmask 0
          %682 = vst.msk [vmem:[#allocation10] sm:$0x1] %vm681, %v680
        $region56: #{tpu_custom_call.1} parent=35 // pred_fallthru
          _
        // Predicated region
        $region57: #{tpu_custom_call.1} parent=35 // pred_check
          %p683 = pneg %p159
        $region58: #{tpu_custom_call.1} parent=35 // pred_check_branch
          %685 = sbr.rel (%p683) target = $region60
        $region59: #{tpu_custom_call.1} parent=35 // pred_region
          %s687 = ssub.s32 16, 16
          %688 = vsyncadd [#allocation6], %s687
          %s690 = sshll.u32 [#allocation10], 4
          %s691 = int_to_ptr.vmem [resolvable:$true] %s690
          %693 = dma.vmem_to_hbm [thread:$0]  %s691, 16, %s4, [#allocation6]
        $region60: #{tpu_custom_call.1} parent=35 // pred_fallthru
          _
        // Predicated region
        $region61: #{tpu_custom_call.1} parent=35 // pred_check
          %p694 = pneg %p159
        $region62: #{tpu_custom_call.1} parent=35 // pred_check_branch
          %696 = sbr.rel (%p694) target = $region64
        $region63: #{tpu_custom_call.1} parent=35 // pred_region
          %697 = dma.done [#allocation6], 16
        $region64: #{tpu_custom_call.1} parent=35 // pred_fallthru
          _
      $region36: #{tpu_custom_call.1} parent=5 // pred_fallthru
        _
      %p698 = scmp.le.s32.totalorder 2, %s17
      // Predicated region
      $region65: #{tpu_custom_call.1} parent=5 // pred_check
        %p699 = pneg %p698
      $region66: #{tpu_custom_call.1} parent=5 // pred_check_branch
        %701 = sbr.rel (%p699) target = $region68
      $region67: #{tpu_custom_call.1} parent=5 // pred_region
        %s702 = ssub.s32 %s17, 2
      $region68: #{tpu_custom_call.1} parent=5 // pred_fallthru
        _
    $region6: #{tpu_custom_call.1} parent=1 // loop_footer
      %s21 = sadd.s32 1, %s17
    $region7: #{tpu_custom_call.1} parent=1 // loop_footer_branch
      %16 = sbr.rel target = $region3
    $region8: #{tpu_custom_call.1} parent=1 // loop_exit
      _
    %703 = vsyncpa [#allocation5], 1
    %s704 = scalar_lea.sflag [#allocation5], 1
    %705 = vsyncpa %s704, 1
    %706 = vsyncpa [#allocation8], 1
    %s707 = scalar_lea.sflag [#allocation8], 1
    %708 = vsyncpa %s707, 1
    %709 = vsyncpa [#allocation6], 1
    %s710 = scalar_lea.sflag [#allocation6], 1
    %711 = vsyncpa %s710, 1

</llo_original>
